<compile_context>
chip_gen: v6e
topology: v6e:2x2x1
jax: 0.10.0
libtpu: 0.0.40
codegen_flags: <defaults>
</compile_context>

<pallas_src>
import jax
import jax.numpy as jnp
from jax.experimental import pallas as pl
from jax.experimental.pallas import tpu as pltpu


def _round_up(x, m):
    return (x + m - 1) // m * m


def _cdiv(a, b):
    return (a + b - 1) // b


def lenet31_kernel(x_ref, w1_ref, b1_ref, w2_ref, b2_ref, w3_ref, b3_ref,
                   out_ref):
    # --- layer 1: Linear(in, 300) + ReLU (bf16 MXU, f32 accumulate) -----
    x_bf16 = x_ref[...].astype(jnp.bfloat16)
    h1 = jnp.dot(x_bf16, w1_ref[...], preferred_element_type=jnp.float32)
    h1 = jnp.maximum(h1 + b1_ref[...], 0.0)

    # --- layer 2: Linear(300, 100) + ReLU -------------------------------
    h2 = jnp.dot(h1.astype(jnp.bfloat16), w2_ref[...],
                 preferred_element_type=jnp.float32)
    h2 = jnp.maximum(h2 + b2_ref[...], 0.0)

    # --- layer 3: Linear(100, out) ---------------------------------------
    # Padded class lanes get bias = -1e30 (baked in by the wrapper), so they
    # contribute exp(-huge) == 0 to the softmax; no explicit mask needed.
    logits = jnp.dot(h2.astype(jnp.bfloat16), w3_ref[...],
                     preferred_element_type=jnp.float32)
    logits = logits + b3_ref[...]

    # --- softmax over the (padded) class axis, numerically stable --------
    m = jnp.max(logits, axis=-1, keepdims=True)
    e = jnp.exp(logits - m)
    denom = jnp.sum(e, axis=-1, keepdims=True)
    out_ref[...] = e / denom            # exact divide (keeps row sums ~1.0)


def lenet31_forward(x, params, *, batch_tile=1024):
    """x: (B, C, H, W) float32 (NCHW, like PyTorch). Returns (B, out_size)."""
    w1, b1, w2, b2, w3, b3 = params
    B = x.shape[0]
    x2d = x.reshape(B, -1).astype(jnp.float32)           # flatten (glue in JAX)
    in_dim = x2d.shape[1]
    h1_dim, h2_dim, out_dim = w1.shape[1], w2.shape[1], w3.shape[1]

    # Lane-aligned (zero-padded) feature sizes -- numerically exact.
    in_p = _round_up(in_dim, 128)
    h1_p = _round_up(h1_dim, 128)     # 300 -> 384
    h2_p = _round_up(h2_dim, 128)     # 100 -> 128
    out_p = _round_up(out_dim, 128)   # 10  -> 128

    # Batch tiling: tiles as large as ~batch_tile rows to amortize per-step
    # overhead, but >= 2 grid steps when B allows it (v7x megacore), and TB
    # chosen to keep batch padding under one 8-row sublane group.
    n_tiles = _cdiv(B, batch_tile)
    if n_tiles == 1 and B > 16:
        n_tiles = 2
    TB = _round_up(_cdiv(B, n_tiles), 8)
    B_p = _round_up(B, TB)
    grid = (B_p // TB,)

    def pad2(a, rows, cols):
        return jnp.pad(a, ((0, rows - a.shape[0]), (0, cols - a.shape[1])))

    # x stays f32 (no extra HBM pad/cast pass); bf16 cast happens in-kernel.
    x_p = pad2(x2d, B_p, in_p)
    w1_p = pad2(w1, in_p, h1_p).astype(jnp.bfloat16)
    w2_p = pad2(w2, h1_p, h2_p).astype(jnp.bfloat16)
    w3_p = pad2(w3, h2_p, out_p).astype(jnp.bfloat16)
    # Biases stay f32 (VPU math in f32), shaped (1, N) for clean broadcast.
    b1_p = jnp.pad(b1, (0, h1_p - h1_dim)).reshape(1, h1_p).astype(jnp.float32)
    b2_p = jnp.pad(b2, (0, h2_p - h2_dim)).reshape(1, h2_p).astype(jnp.float32)
    # Padded class lanes get -1e30 so exp() underflows to 0 (mask baked in).
    b3_p = jnp.pad(b3.astype(jnp.float32), (0, out_p - out_dim),
                   constant_values=-1e30).reshape(1, out_p)

    const = lambda shape: pl.BlockSpec(shape, lambda i: (0,) * len(shape))

    out_padded = pl.pallas_call(
        lenet31_kernel,
        out_shape=jax.ShapeDtypeStruct((B_p, out_p), jnp.float32),
        grid=grid,
        in_specs=[
            pl.BlockSpec((TB, in_p), lambda i: (i, 0)),   # x: batch-tiled, f32
            const((in_p, h1_p)), const((1, h1_p)),        # weights/biases
            const((h1_p, h2_p)), const((1, h2_p)),        #   resident in VMEM
            const((h2_p, out_p)), const((1, out_p)),
        ],
        out_specs=pl.BlockSpec((TB, out_p), lambda i: (i, 0)),
        compiler_params=pltpu.CompilerParams(
            dimension_semantics=("parallel",)),
    )(x_p, w1_p, b1_p, w2_p, b2_p, w3_p, b3_p)

    return out_padded[:B, :out_dim]


def init_params(key, img_size, out_size):
    """Deterministic init mirroring nn.Linear's U(-1/sqrt(in), 1/sqrt(in)).
    Weights stored as (in_features, out_features)."""
    in_dim = img_size * img_size
    dims = [(in_dim, 300), (300, 100), (100, out_size)]
    params = []
    for (fan_in, fan_out) in dims:
        key, kw, kb = jax.random.split(key, 3)
        bound = 1.0 / jnp.sqrt(fan_in)
        w = jax.random.uniform(kw, (fan_in, fan_out), jnp.float32,
                               minval=-bound, maxval=bound)
        b = jax.random.uniform(kb, (fan_out,), jnp.float32,
                               minval=-bound, maxval=bound)
        params.extend([w, b])
    return tuple(params)


def lenet31_reference(x, params):
    """Pure-JAX f32 reference for correctness checking."""
    w1, b1, w2, b2, w3, b3 = params
    h = x.reshape(x.shape[0], -1)
    h = jnp.maximum(h @ w1 + b1, 0.0)
    h = jnp.maximum(h @ w2 + b2, 0.0)
    logits = h @ w3 + b3
    return jax.nn.softmax(logits, axis=-1)


if __name__ == "__main__":
    img_size = 16     # in_dim = 256
    out_size = 10
    batch = 2

    key = jax.random.PRNGKey(0)
    key, kx = jax.random.split(key)
    x = jax.random.normal(kx, (batch, 1, img_size, img_size), jnp.float32)

    params = init_params(key, img_size, out_size)

    probs = lenet31_forward(x, params)
    jax.block_until_ready(probs)

    assert probs.shape == (batch, out_size)

    # Sanity: softmax rows sum to 1 (exact f32 divide -> ~1e-7 error).
    row_sums = jnp.sum(probs, axis=-1)
    assert bool(jnp.all(jnp.abs(row_sums - 1.0) < 1e-5))

    # Sanity: matches f32 reference within bf16 matmul tolerance.
    ref = lenet31_reference(x, params)
    assert bool(jnp.max(jnp.abs(probs - ref)) < 1e-2)

    print("KERNEL_OK")
</pallas_src>

<mosaic_0001>
module attributes {stable_mosaic.version = 11 : i64} {
  func.func @lenet31_kernel(%arg0: i32, %arg1: memref<8x256xf32, #tpu.memory_space<vmem>>, %arg2: memref<256x384xbf16, #tpu.memory_space<vmem>>, %arg3: memref<1x384xf32, #tpu.memory_space<vmem>>, %arg4: memref<384x128xbf16, #tpu.memory_space<vmem>>, %arg5: memref<1x128xf32, #tpu.memory_space<vmem>>, %arg6: memref<128x128xbf16, #tpu.memory_space<vmem>>, %arg7: memref<1x128xf32, #tpu.memory_space<vmem>>, %arg8: memref<8x128xf32, #tpu.memory_space<vmem>>) attributes {dimension_semantics = [#tpu.dimension_semantics<parallel>], iteration_bounds = array<i64: 1>, scalar_prefetch = 0 : i64, scratch_operands = 0 : i64, tpu.core_type = #tpu.core_type<tc>, window_params = [{transform_indices = @transform_0, window_bounds = array<i64: 8, 256>}, {pipeline_mode = #tpu.pipeline_mode<synchronous>, transform_indices = @transform_1, window_bounds = array<i64: 256, 384>}, {pipeline_mode = #tpu.pipeline_mode<synchronous>, transform_indices = @transform_2, window_bounds = array<i64: 1, 384>}, {pipeline_mode = #tpu.pipeline_mode<synchronous>, transform_indices = @transform_3, window_bounds = array<i64: 384, 128>}, {pipeline_mode = #tpu.pipeline_mode<synchronous>, transform_indices = @transform_4, window_bounds = array<i64: 1, 128>}, {pipeline_mode = #tpu.pipeline_mode<synchronous>, transform_indices = @transform_5, window_bounds = array<i64: 128, 128>}, {pipeline_mode = #tpu.pipeline_mode<synchronous>, transform_indices = @transform_6, window_bounds = array<i64: 1, 128>}, {transform_indices = @transform_7, window_bounds = array<i64: 8, 128>}]} {
    %c0 = arith.constant 0 : index
    %c0_0 = arith.constant 0 : index
    %0 = vector.load %arg1[%c0, %c0_0] : memref<8x256xf32, #tpu.memory_space<vmem>>, vector<8x256xf32>
    %1 = arith.truncf %0 : vector<8x256xf32> to vector<8x256xbf16>
    %c0_1 = arith.constant 0 : index
    %c0_2 = arith.constant 0 : index
    %2 = vector.load %arg2[%c0_1, %c0_2] : memref<256x384xbf16, #tpu.memory_space<vmem>>, vector<256x384xbf16>
    %cst = arith.constant dense<0.000000e+00> : vector<8x384xf32>
    %3 = tpu.matmul %1, %2, %cst {dimension_numbers = #tpu.dot_dimension_numbers<[1], [0], [0], [1], [0, 0, 1, 1], [], []>} : vector<8x256xbf16>, vector<256x384xbf16>, vector<8x384xf32> -> vector<8x384xf32>
    %c0_3 = arith.constant 0 : index
    %c0_4 = arith.constant 0 : index
    %4 = vector.load %arg3[%c0_3, %c0_4] : memref<1x384xf32, #tpu.memory_space<vmem>>, vector<1x384xf32>
    %5 = vector.broadcast %4 : vector<1x384xf32> to vector<8x384xf32>
    %6 = arith.addf %3, %5 : vector<8x384xf32>
    %cst_5 = arith.constant 0.000000e+00 : f32
    %7 = vector.broadcast %cst_5 : f32 to vector<8x384xf32>
    %8 = arith.maximumf %6, %7 : vector<8x384xf32>
    %9 = arith.truncf %8 : vector<8x384xf32> to vector<8x384xbf16>
    %c0_6 = arith.constant 0 : index
    %c0_7 = arith.constant 0 : index
    %10 = vector.load %arg4[%c0_6, %c0_7] : memref<384x128xbf16, #tpu.memory_space<vmem>>, vector<384x128xbf16>
    %cst_8 = arith.constant dense<0.000000e+00> : vector<8x128xf32>
    %11 = tpu.matmul %9, %10, %cst_8 {dimension_numbers = #tpu.dot_dimension_numbers<[1], [0], [0], [1], [0, 0, 1, 1], [], []>} : vector<8x384xbf16>, vector<384x128xbf16>, vector<8x128xf32> -> vector<8x128xf32>
    %c0_9 = arith.constant 0 : index
    %c0_10 = arith.constant 0 : index
    %12 = vector.load %arg5[%c0_9, %c0_10] : memref<1x128xf32, #tpu.memory_space<vmem>>, vector<1x128xf32>
    %13 = vector.broadcast %12 : vector<1x128xf32> to vector<8x128xf32>
    %14 = arith.addf %11, %13 : vector<8x128xf32>
    %cst_11 = arith.constant 0.000000e+00 : f32
    %15 = vector.broadcast %cst_11 : f32 to vector<8x128xf32>
    %16 = arith.maximumf %14, %15 : vector<8x128xf32>
    %17 = arith.truncf %16 : vector<8x128xf32> to vector<8x128xbf16>
    %c0_12 = arith.constant 0 : index
    %c0_13 = arith.constant 0 : index
    %18 = vector.load %arg6[%c0_12, %c0_13] : memref<128x128xbf16, #tpu.memory_space<vmem>>, vector<128x128xbf16>
    %cst_14 = arith.constant dense<0.000000e+00> : vector<8x128xf32>
    %19 = tpu.matmul %17, %18, %cst_14 {dimension_numbers = #tpu.dot_dimension_numbers<[1], [0], [0], [1], [0, 0, 1, 1], [], []>} : vector<8x128xbf16>, vector<128x128xbf16>, vector<8x128xf32> -> vector<8x128xf32>
    %c0_15 = arith.constant 0 : index
    %c0_16 = arith.constant 0 : index
    %20 = vector.load %arg7[%c0_15, %c0_16] : memref<1x128xf32, #tpu.memory_space<vmem>>, vector<1x128xf32>
    %21 = vector.broadcast %20 : vector<1x128xf32> to vector<8x128xf32>
    %22 = arith.addf %19, %21 : vector<8x128xf32>
    %cst_17 = arith.constant dense<0xFF800000> : vector<8xf32>
    %23 = vector.multi_reduction <maximumf>, %22, %cst_17 [1] : vector<8x128xf32> to vector<8xf32>
    %24 = vector.shape_cast %23 : vector<8xf32> to vector<8x1xf32>
    %25 = vector.broadcast %24 : vector<8x1xf32> to vector<8x128xf32>
    %26 = arith.subf %22, %25 : vector<8x128xf32>
    %27 = math.exp %26 : vector<8x128xf32>
    %cst_18 = arith.constant dense<0.000000e+00> : vector<8xf32>
    %28 = vector.multi_reduction <add>, %27, %cst_18 [1] : vector<8x128xf32> to vector<8xf32>
    %29 = vector.shape_cast %28 : vector<8xf32> to vector<8x1xf32>
    %30 = vector.broadcast %29 : vector<8x1xf32> to vector<8x128xf32>
    %31 = arith.divf %27, %30 : vector<8x128xf32>
    %c0_19 = arith.constant 0 : index
    %c0_20 = arith.constant 0 : index
    %32 = vector.load %arg8[%c0_19, %c0_20] : memref<8x128xf32, #tpu.memory_space<vmem>>, vector<8x128xf32>
    tpu.vector_store %arg8[%c0_19, %c0_20], %31 {strides = array<i32>} : memref<8x128xf32, #tpu.memory_space<vmem>>, vector<8x128xf32>,
    return
  }
  func.func @transform_0(%arg0: i32) -> (i32, i32) {
    %c0_i32 = arith.constant 0 : i32
    %c0_i32_0 = arith.constant 0 : i32
    return %arg0, %c0_i32 : i32, i32
  }
  func.func @transform_1(%arg0: i32) -> (i32, i32) {
    %c0_i32 = arith.constant 0 : i32
    %c0_i32_0 = arith.constant 0 : i32
    %c0_i32_1 = arith.constant 0 : i32
    return %c0_i32, %c0_i32_0 : i32, i32
  }
  func.func @transform_2(%arg0: i32) -> (i32, i32) {
    %c0_i32 = arith.constant 0 : i32
    %c0_i32_0 = arith.constant 0 : i32
    %c0_i32_1 = arith.constant 0 : i32
    return %c0_i32, %c0_i32_0 : i32, i32
  }
  func.func @transform_3(%arg0: i32) -> (i32, i32) {
    %c0_i32 = arith.constant 0 : i32
    %c0_i32_0 = arith.constant 0 : i32
    %c0_i32_1 = arith.constant 0 : i32
    return %c0_i32, %c0_i32_0 : i32, i32
  }
  func.func @transform_4(%arg0: i32) -> (i32, i32) {
    %c0_i32 = arith.constant 0 : i32
    %c0_i32_0 = arith.constant 0 : i32
    %c0_i32_1 = arith.constant 0 : i32
    return %c0_i32, %c0_i32_0 : i32, i32
  }
  func.func @transform_5(%arg0: i32) -> (i32, i32) {
    %c0_i32 = arith.constant 0 : i32
    %c0_i32_0 = arith.constant 0 : i32
    %c0_i32_1 = arith.constant 0 : i32
    return %c0_i32, %c0_i32_0 : i32, i32
  }
  func.func @transform_6(%arg0: i32) -> (i32, i32) {
    %c0_i32 = arith.constant 0 : i32
    %c0_i32_0 = arith.constant 0 : i32
    %c0_i32_1 = arith.constant 0 : i32
    return %c0_i32, %c0_i32_0 : i32, i32
  }
  func.func @transform_7(%arg0: i32) -> (i32, i32) {
    %c0_i32 = arith.constant 0 : i32
    %c0_i32_0 = arith.constant 0 : i32
    return %arg0, %c0_i32 : i32, i32
  }
}

</mosaic_0001>

<llo_original>
// kernel: tpu_custom_call.1
$region0: #{tpu_custom_call.1}
  #allocation0 [shape = 'u32[]', space=smem, size = 0x4, offset = 0x4, fixed_abs, tag = 'smem constant byte address 0x4 - core index']
  #allocation1 [shape = 'u32[144,128]{1,0:T(1,128)}', space=vmem, size = 0x12000, scoped, tag = 'internal scratch']
  %s0 = inlined_call_operand.hbm [shape: f32[8,256], index: 0, kind: input, shape index: {}]
  %s1 = inlined_call_operand.hbm [shape: bf16[256,384], index: 1, kind: input, shape index: {}]
  %s2 = inlined_call_operand.vmem [shape: f32[1,384], index: 2, kind: input, shape index: {}]
  %s3 = inlined_call_operand.hbm [shape: bf16[384,128], index: 3, kind: input, shape index: {}]
  %s4 = inlined_call_operand.vmem [shape: f32[1,128], index: 4, kind: input, shape index: {}]
  %s5 = inlined_call_operand.hbm [shape: bf16[128,128], index: 5, kind: input, shape index: {}]
  %s6 = inlined_call_operand.vmem [shape: f32[1,128], index: 6, kind: input, shape index: {}]
  %s7 = inlined_call_operand.hbm [shape: f32[8,128], index: 7, kind: output, shape index: {}]
  %s8 = sld [smem:[#allocation0]]
  $region54: #{tpu_custom_call.1} parent=0
    _
  %s10 = ssub.s32 1, %s8
  %s11 = scalar_select 0, %s10, %s8
  $region1: #{tpu_custom_call.1} parent=0
    #allocation2 [shape = 'u8[8192]{0}', space=vmem, size = 0x2000, scoped, tag = 'input window, operand 0, single buffered']
    #allocation3 [shape = 's32[1]{0}', space=sflag, size = 0x4, scoped, tag = 'scoped memory for tpu_custom_call.1']
    #allocation4 [shape = 's32[1]{0}', space=sflag, size = 0x4, scoped, tag = 'scoped memory for tpu_custom_call.1']
    #allocation5 [shape = 'u8[196608]{0}', space=vmem, size = 0x30000, scoped, tag = 'input window, operand 1, single buffered']
    #allocation6 [shape = 's32[1]{0}', space=sflag, size = 0x4, scoped, tag = 'scoped memory for tpu_custom_call.1']
    #allocation7 [shape = 'u8[98304]{0}', space=vmem, size = 0x18000, scoped, tag = 'input window, operand 3, single buffered']
    #allocation8 [shape = 'u8[32768]{0}', space=vmem, size = 0x8000, scoped, tag = 'input window, operand 5, single buffered']
    #allocation9 [shape = 's32[1]{0}', space=sflag, size = 0x4, scoped, tag = 'scoped memory for tpu_custom_call.1']
    #allocation10 [shape = 'u8[4096]{0}', space=vmem, size = 0x1000, scoped, tag = 'output window, operand 0, single buffered']
    %12 = vsyncpa [#allocation3], 0
    %13 = vsyncpa [#allocation6], 0
    %14 = vsyncpa [#allocation9], 0
    %15 = vsyncpa [#allocation4], 0
    // Predicated region
    $region2: #{tpu_custom_call.1} parent=1 // pred_check
      _
    $region3: #{tpu_custom_call.1} parent=1 // pred_check_branch
      %17 = sbr.rel (0) target = $region5
    $region4: #{tpu_custom_call.1} parent=1 // pred_region
      %s19 = ssub.s32 256, 256
      %20 = vsyncadd [#allocation3], %s19
      %s22 = sshll.u32 [#allocation2], 4
      %s23 = int_to_ptr.vmem [resolvable:$true] %s22
      %25 = dma.hbm_to_vmem [thread:$0]  %s0, 256, %s23, [#allocation3]
    $region5: #{tpu_custom_call.1} parent=1 // pred_fallthru
      _
    // Predicated region
    $region6: #{tpu_custom_call.1} parent=1 // pred_check
      _
    $region7: #{tpu_custom_call.1} parent=1 // pred_check_branch
      %27 = sbr.rel (0) target = $region9
    $region8: #{tpu_custom_call.1} parent=1 // pred_region
      %s29 = ssub.s32 6144, 6144
      %30 = vsyncadd [#allocation6], %s29
      %s31 = sshll.u32 [#allocation5], 4
      %s32 = int_to_ptr.vmem [resolvable:$true] %s31
      %37 = dma.hbm_to_vmem [thread:$0]  %s1, 6144, %s32, [#allocation6], 192, 192, 12
    $region9: #{tpu_custom_call.1} parent=1 // pred_fallthru
      _
    // Predicated region
    $region10: #{tpu_custom_call.1} parent=1 // pred_check
      _
    $region11: #{tpu_custom_call.1} parent=1 // pred_check_branch
      %39 = sbr.rel (0) target = $region13
    $region12: #{tpu_custom_call.1} parent=1 // pred_region
      _
    $region13: #{tpu_custom_call.1} parent=1 // pred_fallthru
      _
    // Predicated region
    $region14: #{tpu_custom_call.1} parent=1 // pred_check
      _
    $region15: #{tpu_custom_call.1} parent=1 // pred_check_branch
      %41 = sbr.rel (0) target = $region17
    $region16: #{tpu_custom_call.1} parent=1 // pred_region
      %s43 = ssub.s32 3072, 3072
      %44 = vsyncadd [#allocation6], %s43
      %s45 = sshll.u32 [#allocation7], 4
      %s46 = int_to_ptr.vmem [resolvable:$true] %s45
      %51 = dma.hbm_to_vmem [thread:$0]  %s3, 3072, %s46, [#allocation6], 64, 64, 4
    $region17: #{tpu_custom_call.1} parent=1 // pred_fallthru
      _
    // Predicated region
    $region18: #{tpu_custom_call.1} parent=1 // pred_check
      _
    $region19: #{tpu_custom_call.1} parent=1 // pred_check_branch
      %53 = sbr.rel (0) target = $region21
    $region20: #{tpu_custom_call.1} parent=1 // pred_region
      _
    $region21: #{tpu_custom_call.1} parent=1 // pred_fallthru
      _
    // Predicated region
    $region22: #{tpu_custom_call.1} parent=1 // pred_check
      _
    $region23: #{tpu_custom_call.1} parent=1 // pred_check_branch
      %55 = sbr.rel (0) target = $region25
    $region24: #{tpu_custom_call.1} parent=1 // pred_region
      %s57 = ssub.s32 1024, 1024
      %58 = vsyncadd [#allocation9], %s57
      %s59 = sshll.u32 [#allocation8], 4
      %s60 = int_to_ptr.vmem [resolvable:$true] %s59
      %65 = dma.hbm_to_vmem [thread:$0]  %s5, 1024, %s60, [#allocation9], 64, 64, 4
    $region25: #{tpu_custom_call.1} parent=1 // pred_fallthru
      _
    // Predicated region
    $region26: #{tpu_custom_call.1} parent=1 // pred_check
      _
    $region27: #{tpu_custom_call.1} parent=1 // pred_check_branch
      %67 = sbr.rel (0) target = $region29
    $region28: #{tpu_custom_call.1} parent=1 // pred_region
      _
    $region29: #{tpu_custom_call.1} parent=1 // pred_fallthru
      _
    // Predicated region
    $region30: #{tpu_custom_call.1} parent=1 // pred_check
      _
    $region31: #{tpu_custom_call.1} parent=1 // pred_check_branch
      %69 = sbr.rel (0) target = $region33
    $region32: #{tpu_custom_call.1} parent=1 // pred_region
      %70 = dma.done [#allocation3], 256
    $region33: #{tpu_custom_call.1} parent=1 // pred_fallthru
      _
    // Predicated region
    $region34: #{tpu_custom_call.1} parent=1 // pred_check
      _
    $region35: #{tpu_custom_call.1} parent=1 // pred_check_branch
      %72 = sbr.rel (0) target = $region37
    $region36: #{tpu_custom_call.1} parent=1 // pred_region
      %73 = dma.done [#allocation6], 6144
    $region37: #{tpu_custom_call.1} parent=1 // pred_fallthru
      _
    // Predicated region
    $region38: #{tpu_custom_call.1} parent=1 // pred_check
      _
    $region39: #{tpu_custom_call.1} parent=1 // pred_check_branch
      %75 = sbr.rel (0) target = $region41
    $region40: #{tpu_custom_call.1} parent=1 // pred_region
      %76 = dma.done [#allocation6], 3072
    $region41: #{tpu_custom_call.1} parent=1 // pred_fallthru
      _
    // Predicated region
    $region42: #{tpu_custom_call.1} parent=1 // pred_check
      _
    $region43: #{tpu_custom_call.1} parent=1 // pred_check_branch
      %78 = sbr.rel (0) target = $region45
    $region44: #{tpu_custom_call.1} parent=1 // pred_region
      %79 = dma.done [#allocation9], 1024
    $region45: #{tpu_custom_call.1} parent=1 // pred_fallthru
      _
    %v81 = vld [vmem:[#allocation2] sm:$0xff]
    %v82 = vld [vmem:[#allocation2 + $0x8] sm:$0xff]
    %v83 = vpack.c.bf16 %v81, %v81
    %v84 = vpack.c.bf16 %v82, %v82
    %v85 = vld [vmem:[#allocation5] sm:$0xff]
    %v86 = vld [vmem:[#allocation5 + $0x8] sm:$0xf]
    %v87 = vld [vmem:[#allocation5 + $0xc] sm:$0xff]
    %v88 = vld [vmem:[#allocation5 + $0x14] sm:$0xf]
    %v89 = vld [vmem:[#allocation5 + $0x18] sm:$0xff]
    %v90 = vld [vmem:[#allocation5 + $0x20] sm:$0xf]
    %v91 = vld [vmem:[#allocation5 + $0x24] sm:$0xff]
    %v92 = vld [vmem:[#allocation5 + $0x2c] sm:$0xf]
    %v93 = vld [vmem:[#allocation5 + $0x30] sm:$0xff]
    %v94 = vld [vmem:[#allocation5 + $0x38] sm:$0xf]
    %v95 = vld [vmem:[#allocation5 + $0x3c] sm:$0xff]
    %v96 = vld [vmem:[#allocation5 + $0x44] sm:$0xf]
    %v97 = vld [vmem:[#allocation5 + $0x48] sm:$0xff]
    %v98 = vld [vmem:[#allocation5 + $0x50] sm:$0xf]
    %v99 = vld [vmem:[#allocation5 + $0x54] sm:$0xff]
    %v100 = vld [vmem:[#allocation5 + $0x5c] sm:$0xf]
    %v101 = vld [vmem:[#allocation5 + $0x60] sm:$0xff]
    %v102 = vld [vmem:[#allocation5 + $0x68] sm:$0xf]
    %v103 = vld [vmem:[#allocation5 + $0x6c] sm:$0xff]
    %v104 = vld [vmem:[#allocation5 + $0x74] sm:$0xf]
    %v105 = vld [vmem:[#allocation5 + $0x78] sm:$0xff]
    %v106 = vld [vmem:[#allocation5 + $0x80] sm:$0xf]
    %v107 = vld [vmem:[#allocation5 + $0x84] sm:$0xff]
    %v108 = vld [vmem:[#allocation5 + $0x8c] sm:$0xf]
    %v109 = vld [vmem:[#allocation5 + $0x90] sm:$0xff]
    %v110 = vld [vmem:[#allocation5 + $0x98] sm:$0xf]
    %v111 = vld [vmem:[#allocation5 + $0x9c] sm:$0xff]
    %v112 = vld [vmem:[#allocation5 + $0xa4] sm:$0xf]
    %v113 = vld [vmem:[#allocation5 + $0xa8] sm:$0xff]
    %v114 = vld [vmem:[#allocation5 + $0xb0] sm:$0xf]
    %v115 = vld [vmem:[#allocation5 + $0xb4] sm:$0xff]
    %v116 = vld [vmem:[#allocation5 + $0xbc] sm:$0xf]
    %v117 = vld [vmem:[#allocation5 + $0xc0] sm:$0xff]
    %v118 = vld [vmem:[#allocation5 + $0xc8] sm:$0xf]
    %v119 = vld [vmem:[#allocation5 + $0xcc] sm:$0xff]
    %v120 = vld [vmem:[#allocation5 + $0xd4] sm:$0xf]
    %v121 = vld [vmem:[#allocation5 + $0xd8] sm:$0xff]
    %v122 = vld [vmem:[#allocation5 + $0xe0] sm:$0xf]
    %v123 = vld [vmem:[#allocation5 + $0xe4] sm:$0xff]
    %v124 = vld [vmem:[#allocation5 + $0xec] sm:$0xf]
    %v125 = vld [vmem:[#allocation5 + $0xf0] sm:$0xff]
    %v126 = vld [vmem:[#allocation5 + $0xf8] sm:$0xf]
    %v127 = vld [vmem:[#allocation5 + $0xfc] sm:$0xff]
    %v128 = vld [vmem:[#allocation5 + $0x104] sm:$0xf]
    %v129 = vld [vmem:[#allocation5 + $0x108] sm:$0xff]
    %v130 = vld [vmem:[#allocation5 + $0x110] sm:$0xf]
    %v131 = vld [vmem:[#allocation5 + $0x114] sm:$0xff]
    %v132 = vld [vmem:[#allocation5 + $0x11c] sm:$0xf]
    %v133 = vld [vmem:[#allocation5 + $0x120] sm:$0xff]
    %v134 = vld [vmem:[#allocation5 + $0x128] sm:$0xf]
    %v135 = vld [vmem:[#allocation5 + $0x12c] sm:$0xff]
    %v136 = vld [vmem:[#allocation5 + $0x134] sm:$0xf]
    %v137 = vld [vmem:[#allocation5 + $0x138] sm:$0xff]
    %v138 = vld [vmem:[#allocation5 + $0x140] sm:$0xf]
    %v139 = vld [vmem:[#allocation5 + $0x144] sm:$0xff]
    %v140 = vld [vmem:[#allocation5 + $0x14c] sm:$0xf]
    %v141 = vld [vmem:[#allocation5 + $0x150] sm:$0xff]
    %v142 = vld [vmem:[#allocation5 + $0x158] sm:$0xf]
    %v143 = vld [vmem:[#allocation5 + $0x15c] sm:$0xff]
    %v144 = vld [vmem:[#allocation5 + $0x164] sm:$0xf]
    %v145 = vld [vmem:[#allocation5 + $0x168] sm:$0xff]
    %v146 = vld [vmem:[#allocation5 + $0x170] sm:$0xf]
    %v147 = vld [vmem:[#allocation5 + $0x174] sm:$0xff]
    %v148 = vld [vmem:[#allocation5 + $0x17c] sm:$0xf]
    %v149 = vld [vmem:[%s2] sm:$0x7]
    %v151 = vlaneseq
    %v152 = vshrl.u32 %v151, 7
    %v153 = vsub.s32 0, %v152
    %v154 = vrot.slane %v149, %v153
    %v155 = vlaneseq
    %v156 = vshrl.u32 %v155, 7
    %v157 = vsub.s32 1, %v156
    %v158 = vrot.slane %v149, %v157
    %v159 = vlaneseq
    %v160 = vshrl.u32 %v159, 7
    %v161 = vsub.s32 2, %v160
    %v162 = vrot.slane %v149, %v161
    %v230 = vunpack.c.l.b16 %v85
    %v231 = vunpack.c.h.b16 %v85
    %v232 = vunpack.c.l.b16 %v86
    %v233 = vunpack.c.l.b16 %v87
    %v234 = vunpack.c.h.b16 %v87
    %v235 = vunpack.c.l.b16 %v88
    %v236 = vunpack.c.l.b16 %v89
    %v237 = vunpack.c.h.b16 %v89
    %v238 = vunpack.c.l.b16 %v90
    %v239 = vunpack.c.l.b16 %v91
    %v240 = vunpack.c.h.b16 %v91
    %v241 = vunpack.c.l.b16 %v92
    %v242 = vunpack.c.l.b16 %v93
    %v243 = vunpack.c.h.b16 %v93
    %v244 = vunpack.c.l.b16 %v94
    %v245 = vunpack.c.l.b16 %v95
    %v246 = vunpack.c.h.b16 %v95
    %v247 = vunpack.c.l.b16 %v96
    %v248 = vunpack.c.l.b16 %v97
    %v249 = vunpack.c.h.b16 %v97
    %v250 = vunpack.c.l.b16 %v98
    %v251 = vunpack.c.l.b16 %v99
    %v252 = vunpack.c.h.b16 %v99
    %v253 = vunpack.c.l.b16 %v100
    %v254 = vunpack.c.l.b16 %v101
    %v255 = vunpack.c.h.b16 %v101
    %v256 = vunpack.c.l.b16 %v102
    %v257 = vunpack.c.l.b16 %v103
    %v258 = vunpack.c.h.b16 %v103
    %v259 = vunpack.c.l.b16 %v104
    %v260 = vunpack.c.l.b16 %v105
    %v261 = vunpack.c.h.b16 %v105
    %v262 = vunpack.c.l.b16 %v106
    %v263 = vunpack.c.l.b16 %v107
    %v264 = vunpack.c.h.b16 %v107
    %v265 = vunpack.c.l.b16 %v108
    %v266 = vunpack.c.l.b16 %v109
    %v267 = vunpack.c.h.b16 %v109
    %v268 = vunpack.c.l.b16 %v110
    %v269 = vunpack.c.l.b16 %v111
    %v270 = vunpack.c.h.b16 %v111
    %v271 = vunpack.c.l.b16 %v112
    %v272 = vunpack.c.l.b16 %v113
    %v273 = vunpack.c.h.b16 %v113
    %v274 = vunpack.c.l.b16 %v114
    %v275 = vunpack.c.l.b16 %v115
    %v276 = vunpack.c.h.b16 %v115
    %v277 = vunpack.c.l.b16 %v116
    %v278 = vunpack.c.l.b16 %v117
    %v279 = vunpack.c.h.b16 %v117
    %v280 = vunpack.c.l.b16 %v118
    %v281 = vunpack.c.l.b16 %v119
    %v282 = vunpack.c.h.b16 %v119
    %v283 = vunpack.c.l.b16 %v120
    %v284 = vunpack.c.l.b16 %v121
    %v285 = vunpack.c.h.b16 %v121
    %v286 = vunpack.c.l.b16 %v122
    %v287 = vunpack.c.l.b16 %v123
    %v288 = vunpack.c.h.b16 %v123
    %v289 = vunpack.c.l.b16 %v124
    %v290 = vunpack.c.l.b16 %v125
    %v291 = vunpack.c.h.b16 %v125
    %v292 = vunpack.c.l.b16 %v126
    %v293 = vunpack.c.l.b16 %v127
    %v294 = vunpack.c.h.b16 %v127
    %v295 = vunpack.c.l.b16 %v128
    %v296 = vunpack.c.l.b16 %v129
    %v297 = vunpack.c.h.b16 %v129
    %v298 = vunpack.c.l.b16 %v130
    %v299 = vunpack.c.l.b16 %v131
    %v300 = vunpack.c.h.b16 %v131
    %v301 = vunpack.c.l.b16 %v132
    %v302 = vunpack.c.l.b16 %v133
    %v303 = vunpack.c.h.b16 %v133
    %v304 = vunpack.c.l.b16 %v134
    %v305 = vunpack.c.l.b16 %v135
    %v306 = vunpack.c.h.b16 %v135
    %v307 = vunpack.c.l.b16 %v136
    %v308 = vunpack.c.l.b16 %v137
    %v309 = vunpack.c.h.b16 %v137
    %v310 = vunpack.c.l.b16 %v138
    %v311 = vunpack.c.l.b16 %v139
    %v312 = vunpack.c.h.b16 %v139
    %v313 = vunpack.c.l.b16 %v140
    %v314 = vunpack.c.l.b16 %v141
    %v315 = vunpack.c.h.b16 %v141
    %v316 = vunpack.c.l.b16 %v142
    %v317 = vunpack.c.l.b16 %v143
    %v318 = vunpack.c.h.b16 %v143
    %v319 = vunpack.c.l.b16 %v144
    %v320 = vunpack.c.l.b16 %v145
    %v321 = vunpack.c.h.b16 %v145
    %v322 = vunpack.c.l.b16 %v146
    %v323 = vunpack.c.l.b16 %v147
    %v324 = vunpack.c.h.b16 %v147
    %v325 = vunpack.c.l.b16 %v148
    %v326 = vpack.c.b16 %v233, %v230
    %v327 = vpack.c.b16 %v234, %v231
    %v328 = vpack.c.b16 %v235, %v232
    %v329 = vpack.c.b16 %v239, %v236
    %v330 = vpack.c.b16 %v240, %v237
    %v331 = vpack.c.b16 %v241, %v238
    %v332 = vpack.c.b16 %v245, %v242
    %v333 = vpack.c.b16 %v246, %v243
    %v334 = vpack.c.b16 %v247, %v244
    %v335 = vpack.c.b16 %v251, %v248
    %v336 = vpack.c.b16 %v252, %v249
    %v337 = vpack.c.b16 %v253, %v250
    %v338 = vpack.c.b16 %v257, %v254
    %v339 = vpack.c.b16 %v258, %v255
    %v340 = vpack.c.b16 %v259, %v256
    %v341 = vpack.c.b16 %v263, %v260
    %v342 = vpack.c.b16 %v264, %v261
    %v343 = vpack.c.b16 %v265, %v262
    %v344 = vpack.c.b16 %v269, %v266
    %v345 = vpack.c.b16 %v270, %v267
    %v346 = vpack.c.b16 %v271, %v268
    %v347 = vpack.c.b16 %v275, %v272
    %v348 = vpack.c.b16 %v276, %v273
    %v349 = vpack.c.b16 %v277, %v274
    %v350 = vpack.c.b16 %v281, %v278
    %v351 = vpack.c.b16 %v282, %v279
    %v352 = vpack.c.b16 %v283, %v280
    %v353 = vpack.c.b16 %v287, %v284
    %v354 = vpack.c.b16 %v288, %v285
    %v355 = vpack.c.b16 %v289, %v286
    %v356 = vpack.c.b16 %v293, %v290
    %v357 = vpack.c.b16 %v294, %v291
    %v358 = vpack.c.b16 %v295, %v292
    %v359 = vpack.c.b16 %v299, %v296
    %v360 = vpack.c.b16 %v300, %v297
    %v361 = vpack.c.b16 %v301, %v298
    %v362 = vpack.c.b16 %v305, %v302
    %v363 = vpack.c.b16 %v306, %v303
    %v364 = vpack.c.b16 %v307, %v304
    %v365 = vpack.c.b16 %v311, %v308
    %v366 = vpack.c.b16 %v312, %v309
    %v367 = vpack.c.b16 %v313, %v310
    %v368 = vpack.c.b16 %v317, %v314
    %v369 = vpack.c.b16 %v318, %v315
    %v370 = vpack.c.b16 %v319, %v316
    %v371 = vpack.c.b16 %v323, %v320
    %v372 = vpack.c.b16 %v324, %v321
    %v373 = vpack.c.b16 %v325, %v322
    %422 = vmatprep.subr.bf16.mxu0 %v348
    %423 = vmatpush1.bf16.msra.mxu0 %v347
    %424 = vmatprep.subr.bf16.mxu0 %v345
    %425 = vmatpush1.bf16.msra.mxu0 %v344
    %426 = vmatprep.subr.bf16.mxu0 %v342
    %427 = vmatpush1.bf16.msra.mxu0 %v341
    %428 = vmatprep.subr.bf16.mxu0 %v339
    %429 = vmatpush1.bf16.msra.mxu0 %v338
    %430 = vmatprep.subr.bf16.mxu0 %v336
    %431 = vmatpush1.bf16.msra.mxu0 %v335
    %432 = vmatprep.subr.bf16.mxu0 %v333
    %433 = vmatpush1.bf16.msra.mxu0 %v332
    %434 = vmatprep.subr.bf16.mxu0 %v330
    %435 = vmatpush1.bf16.msra.mxu0 %v329
    %436 = vmatprep.subr.bf16.mxu0 %v327
    %437 = vmatpush1.bf16.msra.mxu0 %v326
    %438 = vmatprep.subr.bf16.mxu0 %v372
    %439 = vmatpush2.bf16.msra.mxu0 %v371
    %440 = vmatprep.subr.bf16.mxu0 %v369
    %441 = vmatpush2.bf16.msra.mxu0 %v368
    %442 = vmatprep.subr.bf16.mxu0 %v366
    %443 = vmatpush2.bf16.msra.mxu0 %v365
    %444 = vmatprep.subr.bf16.mxu0 %v363
    %445 = vmatpush2.bf16.msra.mxu0 %v362
    %446 = vmatprep.subr.bf16.mxu0 %v360
    %447 = vmatpush2.bf16.msra.mxu0 %v359
    %448 = vmatprep.subr.bf16.mxu0 %v357
    %449 = vmatpush2.bf16.msra.mxu0 %v356
    %450 = vmatprep.subr.bf16.mxu0 %v354
    %451 = vmatpush2.bf16.msra.mxu0 %v353
    %452 = vmatprep.subr.bf16.mxu0 %v351
    %453 = vmatpush2.bf16.msra.mxu0 %v350
    %454 = vmatprep.mubr.bf16.mxu0 %v84
    %455 = vmatmul.mubr.bf16.gmra.mxu0 %v83
    %v456 = vpop.f32.mrf.mxu0
    %v457 = vadd.f32 %v154, %v456
    %v458 = vpop.f32.mrf.mxu0
    %v459 = vadd.f32 %v158, %v458
    %v460 = vpop.f32.mrf.mxu0
    %v461 = vpop.f32.mrf.mxu0
    %462 = vdwg.mxu0
    %463 = vmatprep.subr.bf16.mxu0 0
    %464 = vmatpush1.bf16.msra.mxu0 %v349
    %465 = vmatprep.subr.bf16.mxu0 0
    %466 = vmatpush1.bf16.msra.mxu0 %v346
    %467 = vmatprep.subr.bf16.mxu0 0
    %468 = vmatpush1.bf16.msra.mxu0 %v343
    %469 = vmatprep.subr.bf16.mxu0 0
    %470 = vmatpush1.bf16.msra.mxu0 %v340
    %471 = vmatprep.subr.bf16.mxu0 0
    %472 = vmatpush1.bf16.msra.mxu0 %v337
    %473 = vmatprep.subr.bf16.mxu0 0
    %474 = vmatpush1.bf16.msra.mxu0 %v334
    %475 = vmatprep.subr.bf16.mxu0 0
    %476 = vmatpush1.bf16.msra.mxu0 %v331
    %477 = vmatprep.subr.bf16.mxu0 0
    %478 = vmatpush1.bf16.msra.mxu0 %v328
    %479 = vmatprep.subr.bf16.mxu0 0
    %480 = vmatpush2.bf16.msra.mxu0 %v373
    %481 = vmatprep.subr.bf16.mxu0 0
    %482 = vmatpush2.bf16.msra.mxu0 %v370
    %483 = vmatprep.subr.bf16.mxu0 0
    %484 = vmatpush2.bf16.msra.mxu0 %v367
    %485 = vmatprep.subr.bf16.mxu0 0
    %486 = vmatpush2.bf16.msra.mxu0 %v364
    %487 = vmatprep.subr.bf16.mxu0 0
    %488 = vmatpush2.bf16.msra.mxu0 %v361
    %489 = vmatprep.subr.bf16.mxu0 0
    %490 = vmatpush2.bf16.msra.mxu0 %v358
    %491 = vmatprep.subr.bf16.mxu0 0
    %492 = vmatpush2.bf16.msra.mxu0 %v355
    %493 = vmatprep.subr.bf16.mxu0 0
    %494 = vmatpush2.bf16.msra.mxu0 %v352
    %495 = vmatprep.mubr.bf16.mxu0 %v84
    %496 = vmatmul.mubr.bf16.gmra.mxu0 %v83
    %v497 = vpop.f32.mrf.mxu0
    %v498 = vadd.f32 %v162, %v497
    %v499 = vpop.f32.mrf.mxu0
    %v500 = vpop.f32.mrf.mxu0
    %v501 = vpop.f32.mrf.mxu0
    %502 = vdwg.mxu0
    %v503 = vmax.f32 %v457, 0.0
    %v504 = vmax.f32 %v459, 0.0
    %v505 = vmax.f32 %v498, 0.0
    %v506 = vpack.c.bf16 %v503, %v503
    %v507 = vpack.c.bf16 %v504, %v504
    %v508 = vpack.c.bf16 %v505, %v505
    %v509 = vld [vmem:[#allocation7] sm:$0xf]
    %v510 = vld [vmem:[#allocation7 + $0x4] sm:$0xf]
    %v511 = vld [vmem:[#allocation7 + $0x8] sm:$0xf]
    %v512 = vld [vmem:[#allocation7 + $0xc] sm:$0xf]
    %v513 = vld [vmem:[#allocation7 + $0x10] sm:$0xf]
    %v514 = vld [vmem:[#allocation7 + $0x14] sm:$0xf]
    %v515 = vld [vmem:[#allocation7 + $0x18] sm:$0xf]
    %v516 = vld [vmem:[#allocation7 + $0x1c] sm:$0xf]
    %v517 = vld [vmem:[#allocation7 + $0x20] sm:$0xf]
    %v518 = vld [vmem:[#allocation7 + $0x24] sm:$0xf]
    %v519 = vld [vmem:[#allocation7 + $0x28] sm:$0xf]
    %v520 = vld [vmem:[#allocation7 + $0x2c] sm:$0xf]
    %v521 = vld [vmem:[#allocation7 + $0x30] sm:$0xf]
    %v522 = vld [vmem:[#allocation7 + $0x34] sm:$0xf]
    %v523 = vld [vmem:[#allocation7 + $0x38] sm:$0xf]
    %v524 = vld [vmem:[#allocation7 + $0x3c] sm:$0xf]
    %v525 = vld [vmem:[#allocation7 + $0x40] sm:$0xf]
    %v526 = vld [vmem:[#allocation7 + $0x44] sm:$0xf]
    %v527 = vld [vmem:[#allocation7 + $0x48] sm:$0xf]
    %v528 = vld [vmem:[#allocation7 + $0x4c] sm:$0xf]
    %v529 = vld [vmem:[#allocation7 + $0x50] sm:$0xf]
    %v530 = vld [vmem:[#allocation7 + $0x54] sm:$0xf]
    %v531 = vld [vmem:[#allocation7 + $0x58] sm:$0xf]
    %v532 = vld [vmem:[#allocation7 + $0x5c] sm:$0xf]
    %v533 = vld [vmem:[#allocation7 + $0x60] sm:$0xf]
    %v534 = vld [vmem:[#allocation7 + $0x64] sm:$0xf]
    %v535 = vld [vmem:[#allocation7 + $0x68] sm:$0xf]
    %v536 = vld [vmem:[#allocation7 + $0x6c] sm:$0xf]
    %v537 = vld [vmem:[#allocation7 + $0x70] sm:$0xf]
    %v538 = vld [vmem:[#allocation7 + $0x74] sm:$0xf]
    %v539 = vld [vmem:[#allocation7 + $0x78] sm:$0xf]
    %v540 = vld [vmem:[#allocation7 + $0x7c] sm:$0xf]
    %v541 = vld [vmem:[#allocation7 + $0x80] sm:$0xf]
    %v542 = vld [vmem:[#allocation7 + $0x84] sm:$0xf]
    %v543 = vld [vmem:[#allocation7 + $0x88] sm:$0xf]
    %v544 = vld [vmem:[#allocation7 + $0x8c] sm:$0xf]
    %v545 = vld [vmem:[#allocation7 + $0x90] sm:$0xf]
    %v546 = vld [vmem:[#allocation7 + $0x94] sm:$0xf]
    %v547 = vld [vmem:[#allocation7 + $0x98] sm:$0xf]
    %v548 = vld [vmem:[#allocation7 + $0x9c] sm:$0xf]
    %v549 = vld [vmem:[#allocation7 + $0xa0] sm:$0xf]
    %v550 = vld [vmem:[#allocation7 + $0xa4] sm:$0xf]
    %v551 = vld [vmem:[#allocation7 + $0xa8] sm:$0xf]
    %v552 = vld [vmem:[#allocation7 + $0xac] sm:$0xf]
    %v553 = vld [vmem:[#allocation7 + $0xb0] sm:$0xf]
    %v554 = vld [vmem:[#allocation7 + $0xb4] sm:$0xf]
    %v555 = vld [vmem:[#allocation7 + $0xb8] sm:$0xf]
    %v556 = vld [vmem:[#allocation7 + $0xbc] sm:$0xf]
    %v557 = vld [vmem:[%s4] sm:$0x1]
    %v559 = vlaneseq
    %v560 = vshrl.u32 %v559, 7
    %v561 = vsub.s32 0, %v560
    %v562 = vrot.slane %v557, %v561
    %v612 = vunpack.c.l.b16 %v509
    %v613 = vunpack.c.l.b16 %v510
    %v614 = vunpack.c.l.b16 %v511
    %v615 = vunpack.c.l.b16 %v512
    %v616 = vunpack.c.l.b16 %v513
    %v617 = vunpack.c.l.b16 %v514
    %v618 = vunpack.c.l.b16 %v515
    %v619 = vunpack.c.l.b16 %v516
    %v620 = vunpack.c.l.b16 %v517
    %v621 = vunpack.c.l.b16 %v518
    %v622 = vunpack.c.l.b16 %v519
    %v623 = vunpack.c.l.b16 %v520
    %v624 = vunpack.c.l.b16 %v521
    %v625 = vunpack.c.l.b16 %v522
    %v626 = vunpack.c.l.b16 %v523
    %v627 = vunpack.c.l.b16 %v524
    %v628 = vunpack.c.l.b16 %v525
    %v629 = vunpack.c.l.b16 %v526
    %v630 = vunpack.c.l.b16 %v527
    %v631 = vunpack.c.l.b16 %v528
    %v632 = vunpack.c.l.b16 %v529
    %v633 = vunpack.c.l.b16 %v530
    %v634 = vunpack.c.l.b16 %v531
    %v635 = vunpack.c.l.b16 %v532
    %v636 = vunpack.c.l.b16 %v533
    %v637 = vunpack.c.l.b16 %v534
    %v638 = vunpack.c.l.b16 %v535
    %v639 = vunpack.c.l.b16 %v536
    %v640 = vunpack.c.l.b16 %v537
    %v641 = vunpack.c.l.b16 %v538
    %v642 = vunpack.c.l.b16 %v539
    %v643 = vunpack.c.l.b16 %v540
    %v644 = vunpack.c.l.b16 %v541
    %v645 = vunpack.c.l.b16 %v542
    %v646 = vunpack.c.l.b16 %v543
    %v647 = vunpack.c.l.b16 %v544
    %v648 = vunpack.c.l.b16 %v545
    %v649 = vunpack.c.l.b16 %v546
    %v650 = vunpack.c.l.b16 %v547
    %v651 = vunpack.c.l.b16 %v548
    %v652 = vunpack.c.l.b16 %v549
    %v653 = vunpack.c.l.b16 %v550
    %v654 = vunpack.c.l.b16 %v551
    %v655 = vunpack.c.l.b16 %v552
    %v656 = vunpack.c.l.b16 %v553
    %v657 = vunpack.c.l.b16 %v554
    %v658 = vunpack.c.l.b16 %v555
    %v659 = vunpack.c.l.b16 %v556
    %v660 = vpack.c.b16 %v613, %v612
    %v661 = vpack.c.b16 %v615, %v614
    %v662 = vpack.c.b16 %v617, %v616
    %v663 = vpack.c.b16 %v619, %v618
    %v664 = vpack.c.b16 %v621, %v620
    %v665 = vpack.c.b16 %v623, %v622
    %v666 = vpack.c.b16 %v625, %v624
    %v667 = vpack.c.b16 %v627, %v626
    %v668 = vpack.c.b16 %v629, %v628
    %v669 = vpack.c.b16 %v631, %v630
    %v670 = vpack.c.b16 %v633, %v632
    %v671 = vpack.c.b16 %v635, %v634
    %v672 = vpack.c.b16 %v637, %v636
    %v673 = vpack.c.b16 %v639, %v638
    %v674 = vpack.c.b16 %v641, %v640
    %v675 = vpack.c.b16 %v643, %v642
    %v676 = vpack.c.b16 %v645, %v644
    %v677 = vpack.c.b16 %v647, %v646
    %v678 = vpack.c.b16 %v649, %v648
    %v679 = vpack.c.b16 %v651, %v650
    %v680 = vpack.c.b16 %v653, %v652
    %v681 = vpack.c.b16 %v655, %v654
    %v682 = vpack.c.b16 %v657, %v656
    %v683 = vpack.c.b16 %v659, %v658
    %708 = vmatprep.subr.bf16.mxu0 0
    %709 = vmatpush1.bf16.msra.mxu0 %v667
    %710 = vmatprep.subr.bf16.mxu0 0
    %711 = vmatpush1.bf16.msra.mxu0 %v666
    %712 = vmatprep.subr.bf16.mxu0 0
    %713 = vmatpush1.bf16.msra.mxu0 %v665
    %714 = vmatprep.subr.bf16.mxu0 0
    %715 = vmatpush1.bf16.msra.mxu0 %v664
    %716 = vmatprep.subr.bf16.mxu0 0
    %717 = vmatpush1.bf16.msra.mxu0 %v663
    %718 = vmatprep.subr.bf16.mxu0 0
    %719 = vmatpush1.bf16.msra.mxu0 %v662
    %720 = vmatprep.subr.bf16.mxu0 0
    %721 = vmatpush1.bf16.msra.mxu0 %v661
    %722 = vmatprep.subr.bf16.mxu0 0
    %723 = vmatpush1.bf16.msra.mxu0 %v660
    %724 = vmatprep.subr.bf16.mxu0 0
    %725 = vmatpush2.bf16.msra.mxu0 %v675
    %726 = vmatprep.subr.bf16.mxu0 0
    %727 = vmatpush2.bf16.msra.mxu0 %v674
    %728 = vmatprep.subr.bf16.mxu0 0
    %729 = vmatpush2.bf16.msra.mxu0 %v673
    %730 = vmatprep.subr.bf16.mxu0 0
    %731 = vmatpush2.bf16.msra.mxu0 %v672
    %732 = vmatprep.subr.bf16.mxu0 0
    %733 = vmatpush2.bf16.msra.mxu0 %v671
    %734 = vmatprep.subr.bf16.mxu0 0
    %735 = vmatpush2.bf16.msra.mxu0 %v670
    %736 = vmatprep.subr.bf16.mxu0 0
    %737 = vmatpush2.bf16.msra.mxu0 %v669
    %738 = vmatprep.subr.bf16.mxu0 0
    %739 = vmatpush2.bf16.msra.mxu0 %v668
    %740 = vmatprep.mubr.bf16.mxu0 %v507
    %741 = vmatmul.mubr.bf16.gmra.mxu0 %v506
    %v742 = vpop.f32.mrf.mxu0
    %v743 = vadd.f32 %v562, %v742
    %v744 = vpop.f32.mrf.mxu0
    %v745 = vpop.f32.mrf.mxu0
    %v746 = vpop.f32.mrf.mxu0
    %747 = vdwg.mxu0
    %748 = vmatprep.subr.bf16.mxu0 0
    %749 = vmatpush1.bf16.msra.mxu0 %v683
    %750 = vmatprep.subr.bf16.mxu0 0
    %751 = vmatpush1.bf16.msra.mxu0 %v682
    %752 = vmatprep.subr.bf16.mxu0 0
    %753 = vmatpush1.bf16.msra.mxu0 %v681
    %754 = vmatprep.subr.bf16.mxu0 0
    %755 = vmatpush1.bf16.msra.mxu0 %v680
    %756 = vmatprep.subr.bf16.mxu0 0
    %757 = vmatpush1.bf16.msra.mxu0 %v679
    %758 = vmatprep.subr.bf16.mxu0 0
    %759 = vmatpush1.bf16.msra.mxu0 %v678
    %760 = vmatprep.subr.bf16.mxu0 0
    %761 = vmatpush1.bf16.msra.mxu0 %v677
    %762 = vmatprep.subr.bf16.mxu0 0
    %763 = vmatpush1.bf16.msra.mxu0 %v676
    %764 = vmatprep.subr.bf16.mxu0 0
    %765 = vmatpush2.bf16.msra.mxu0 0
    %766 = vmatprep.subr.bf16.mxu0 0
    %767 = vmatpush2.bf16.msra.mxu0 0
    %768 = vmatprep.subr.bf16.mxu0 0
    %769 = vmatpush2.bf16.msra.mxu0 0
    %770 = vmatprep.subr.bf16.mxu0 0
    %771 = vmatpush2.bf16.msra.mxu0 0
    %772 = vmatprep.subr.bf16.mxu0 0
    %773 = vmatpush2.bf16.msra.mxu0 0
    %774 = vmatprep.subr.bf16.mxu0 0
    %775 = vmatpush2.bf16.msra.mxu0 0
    %776 = vmatprep.subr.bf16.mxu0 0
    %777 = vmatpush2.bf16.msra.mxu0 0
    %778 = vmatprep.subr.bf16.mxu0 0
    %779 = vmatpush2.bf16.msra.mxu0 0
    %780 = vmatprep.mubr.bf16.mxu0 0
    %781 = vmatmul.mubr.bf16.gmra.mxu0 %v508
    %v782 = vpop.f32.mrf.mxu0
    %v783 = vadd.f32 %v743, %v782
    %v784 = vpop.f32.mrf.mxu0
    %v785 = vpop.f32.mrf.mxu0
    %v786 = vpop.f32.mrf.mxu0
    %787 = vdwg.mxu0
    %v788 = vmax.f32 %v783, 0.0
    %v789 = vpack.c.bf16 %v788, %v788
    %v790 = vld [vmem:[#allocation8] sm:$0xf]
    %v791 = vld [vmem:[#allocation8 + $0x4] sm:$0xf]
    %v792 = vld [vmem:[#allocation8 + $0x8] sm:$0xf]
    %v793 = vld [vmem:[#allocation8 + $0xc] sm:$0xf]
    %v794 = vld [vmem:[#allocation8 + $0x10] sm:$0xf]
    %v795 = vld [vmem:[#allocation8 + $0x14] sm:$0xf]
    %v796 = vld [vmem:[#allocation8 + $0x18] sm:$0xf]
    %v797 = vld [vmem:[#allocation8 + $0x1c] sm:$0xf]
    %v798 = vld [vmem:[#allocation8 + $0x20] sm:$0xf]
    %v799 = vld [vmem:[#allocation8 + $0x24] sm:$0xf]
    %v800 = vld [vmem:[#allocation8 + $0x28] sm:$0xf]
    %v801 = vld [vmem:[#allocation8 + $0x2c] sm:$0xf]
    %v802 = vld [vmem:[#allocation8 + $0x30] sm:$0xf]
    %v803 = vld [vmem:[#allocation8 + $0x34] sm:$0xf]
    %v804 = vld [vmem:[#allocation8 + $0x38] sm:$0xf]
    %v805 = vld [vmem:[#allocation8 + $0x3c] sm:$0xf]
    %v806 = vld [vmem:[%s6] sm:$0x1]
    %v808 = vlaneseq
    %v809 = vshrl.u32 %v808, 7
    %v810 = vsub.s32 0, %v809
    %v811 = vrot.slane %v806, %v810
    %v829 = vunpack.c.l.b16 %v790
    %v830 = vunpack.c.l.b16 %v791
    %v831 = vunpack.c.l.b16 %v792
    %v832 = vunpack.c.l.b16 %v793
    %v833 = vunpack.c.l.b16 %v794
    %v834 = vunpack.c.l.b16 %v795
    %v835 = vunpack.c.l.b16 %v796
    %v836 = vunpack.c.l.b16 %v797
    %v837 = vunpack.c.l.b16 %v798
    %v838 = vunpack.c.l.b16 %v799
    %v839 = vunpack.c.l.b16 %v800
    %v840 = vunpack.c.l.b16 %v801
    %v841 = vunpack.c.l.b16 %v802
    %v842 = vunpack.c.l.b16 %v803
    %v843 = vunpack.c.l.b16 %v804
    %v844 = vunpack.c.l.b16 %v805
    %v845 = vpack.c.b16 %v830, %v829
    %v846 = vpack.c.b16 %v832, %v831
    %v847 = vpack.c.b16 %v834, %v833
    %v848 = vpack.c.b16 %v836, %v835
    %v849 = vpack.c.b16 %v838, %v837
    %v850 = vpack.c.b16 %v840, %v839
    %v851 = vpack.c.b16 %v842, %v841
    %v852 = vpack.c.b16 %v844, %v843
    %861 = vmatprep.subr.bf16.mxu0 0
    %862 = vmatpush1.bf16.msra.mxu0 %v852
    %863 = vmatprep.subr.bf16.mxu0 0
    %864 = vmatpush1.bf16.msra.mxu0 %v851
    %865 = vmatprep.subr.bf16.mxu0 0
    %866 = vmatpush1.bf16.msra.mxu0 %v850
    %867 = vmatprep.subr.bf16.mxu0 0
    %868 = vmatpush1.bf16.msra.mxu0 %v849
    %869 = vmatprep.subr.bf16.mxu0 0
    %870 = vmatpush1.bf16.msra.mxu0 %v848
    %871 = vmatprep.subr.bf16.mxu0 0
    %872 = vmatpush1.bf16.msra.mxu0 %v847
    %873 = vmatprep.subr.bf16.mxu0 0
    %874 = vmatpush1.bf16.msra.mxu0 %v846
    %875 = vmatprep.subr.bf16.mxu0 0
    %876 = vmatpush1.bf16.msra.mxu0 %v845
    %877 = vmatprep.subr.bf16.mxu0 0
    %878 = vmatpush2.bf16.msra.mxu0 0
    %879 = vmatprep.subr.bf16.mxu0 0
    %880 = vmatpush2.bf16.msra.mxu0 0
    %881 = vmatprep.subr.bf16.mxu0 0
    %882 = vmatpush2.bf16.msra.mxu0 0
    %883 = vmatprep.subr.bf16.mxu0 0
    %884 = vmatpush2.bf16.msra.mxu0 0
    %885 = vmatprep.subr.bf16.mxu0 0
    %886 = vmatpush2.bf16.msra.mxu0 0
    %887 = vmatprep.subr.bf16.mxu0 0
    %888 = vmatpush2.bf16.msra.mxu0 0
    %889 = vmatprep.subr.bf16.mxu0 0
    %890 = vmatpush2.bf16.msra.mxu0 0
    %891 = vmatprep.subr.bf16.mxu0 0
    %892 = vmatpush2.bf16.msra.mxu0 0
    %893 = vmatprep.mubr.bf16.mxu0 0
    %894 = vmatmul.mubr.bf16.gmra.mxu0 %v789
    %v895 = vpop.f32.mrf.mxu0
    %v896 = vadd.f32 %v811, %v895
    %v897 = vpop.f32.mrf.mxu0
    %v898 = vpop.f32.mrf.mxu0
    %v899 = vpop.f32.mrf.mxu0
    %900 = vdwg.mxu0
    %901 = vmax.xlane.f32.xlu0 %v896
    %v902 = vpop.xlane.xlu0 %901
    %v903 = vsub.f32 %v896, %v902
    %v904 = vmul.f32 %v903, 1.442695
    %v905 = vpow.pop %v904
    %906 = vadd.xlane.f32.xlu0 %v905
    %v907 = vpop.xlane.xlu0 %906
    %v908 = vrcp.pop %v907
    %v909 = vmul.f32 %v905, %v908
    %910 = vst [vmem:[#allocation10] sm:$0xff] %v909
    // Predicated region
    $region46: #{tpu_custom_call.1} parent=1 // pred_check
      _
    $region47: #{tpu_custom_call.1} parent=1 // pred_check_branch
      %912 = sbr.rel (0) target = $region49
    $region48: #{tpu_custom_call.1} parent=1 // pred_region
      %s914 = ssub.s32 128, 128
      %915 = vsyncadd [#allocation4], %s914
      %s917 = sshll.u32 [#allocation10], 4
      %s918 = int_to_ptr.vmem [resolvable:$true] %s917
      %920 = dma.vmem_to_hbm [thread:$0]  %s918, 128, %s7, [#allocation4]
    $region49: #{tpu_custom_call.1} parent=1 // pred_fallthru
      _
    // Predicated region
    $region50: #{tpu_custom_call.1} parent=1 // pred_check
      _
    $region51: #{tpu_custom_call.1} parent=1 // pred_check_branch
      %922 = sbr.rel (0) target = $region53
    $region52: #{tpu_custom_call.1} parent=1 // pred_region
      %923 = dma.done [#allocation4], 128
    $region53: #{tpu_custom_call.1} parent=1 // pred_fallthru
      _
    %924 = vsyncpa [#allocation3], 1
    %925 = vsyncpa [#allocation6], 1
    %926 = vsyncpa [#allocation9], 1
    %927 = vsyncpa [#allocation4], 1

</llo_original>
